<compile_context>
chip_gen: v7x
topology: tpu7x:2x2x1
jax: 0.10.0
libtpu: 0.0.40
codegen_flags: <defaults>
</compile_context>

<pallas_src>
import functools

import jax
import jax.numpy as jnp
from jax.experimental import pallas as pl
from jax.experimental.pallas import tpu as pltpu


def _item_embedding_packed_kernel(fea_ref, wfeat_ref, wrate_ref, out_ref, *,
                                  num_rate, feat_cols):
    """One batch tile, two logical items packed per physical row.

    fea_ref   : [TB, 2F]     int32  raw item feature rows (item 2i | item 2i+1)
    wfeat_ref : [2F, 4D+2]   f32    genre weights aligned to raw feature columns
                                    (+2 'ones' columns -> per-item genre counts)
    wrate_ref : [2R, 4D+2]   f32    rate embedding table, duplicated per item
    out_ref   : [TB, 4D]     f32    [rate_A | genre_A | rate_B | genre_B]
    """
    feats = fea_ref[...]                                   # [TB, 2F] int32
    tb = feats.shape[0]
    d4 = out_ref.shape[1]                                  # 4*D (=128 for D=32)
    d = d4 // 4

    x = feats.astype(jnp.float32)                          # [TB, 2F]

    # One-hot rate indices for both packed items in lanes [0, 2R).
    iota = jax.lax.broadcasted_iota(jnp.int32, (tb, 2 * num_rate), 1)
    rate_a = feats[:, 1:2]                                 # [TB, 1]
    rate_b = feats[:, feat_cols + 1:feat_cols + 2] + num_rate
    target = jnp.where(iota < num_rate, rate_a, rate_b)
    one_hot = (iota == target).astype(jnp.float32)         # [TB, 2R]

    # Fused MXU pass. fused = [rateA | genreA | rateB | genreB | cntA | cntB].
    fused = (jnp.dot(x, wfeat_ref[...], preferred_element_type=jnp.float32)
             + jnp.dot(one_hot, wrate_ref[...], preferred_element_type=jnp.float32))

    emb = fused[:, :d4]                                    # [TB, 4D] (128-aligned slice)
    denom = fused[:, d4:d4 + 2]                            # [TB, 2] genre counts
    inv = pl.reciprocal(denom, approx=False)               # exact: keeps 1e-4 match

    # Scale only the two genre halves; NaN on zero-genre rows matches torch 0/0.
    col = jax.lax.broadcasted_iota(jnp.int32, (tb, d4), 1)
    scale = jnp.where((col >= d) & (col < 2 * d), inv[:, 0:1],
                      jnp.where(col >= 3 * d, inv[:, 1:2], 1.0))
    out_ref[...] = (emb * scale).astype(out_ref.dtype)


def build_item_embedding_params(rate_table, genre_weight, num_feat_cols):
    """Build the fused block-diagonal weights once; reuse across calls.

    rate_table   : [R, D]  torch Embedding weight
    genre_weight : [D, G]  torch Linear weight ([out_features, in_features])
    num_feat_cols: F, number of columns of the raw item feature matrix
    returns      : (w_feat [2F, 4D+2], w_rate [2R, 4D+2]) float32
    """
    num_rate, d = rate_table.shape
    num_genre = genre_weight.shape[1]
    f = num_feat_cols
    assert f >= 2 + num_genre, "item_fea must have at least 2+num_genre columns"
    wcols = 4 * d + 2
    gt = genre_weight.T.astype(jnp.float32)                # [G, D]

    w_feat = jnp.zeros((2 * f, wcols), jnp.float32)
    w_feat = w_feat.at[2:2 + num_genre, d:2 * d].set(gt)              # genre A emb
    w_feat = w_feat.at[2:2 + num_genre, 4 * d].set(1.0)               # genre A count
    w_feat = w_feat.at[f + 2:f + 2 + num_genre, 3 * d:4 * d].set(gt)  # genre B emb
    w_feat = w_feat.at[f + 2:f + 2 + num_genre, 4 * d + 1].set(1.0)   # genre B count

    rt = rate_table.astype(jnp.float32)
    w_rate = jnp.zeros((2 * num_rate, wcols), jnp.float32)
    w_rate = w_rate.at[:num_rate, :d].set(rt)                         # rate A emb
    w_rate = w_rate.at[num_rate:, 2 * d:3 * d].set(rt)                # rate B emb
    return w_feat, w_rate


def item_embedding_ml(item_fea, rate_table=None, genre_weight=None, *,
                      params=None, batch_tile=8192):
    """JAX wrapper reproducing ItemEmbeddingML.forward.

    item_fea : [B, F>=2+G] int   raw item features
    params   : optional (w_feat, w_rate) from build_item_embedding_params;
               build once and reuse across MeLU adaptation steps.
    batch_tile: tile size in logical items (2 items per physical kernel row).
    returns  : [B, 2D] float32   = cat([rate_emb, genre_emb], dim=1)
    """
    item_fea = item_fea.astype(jnp.int32)
    B, F = item_fea.shape
    if params is None:
        params = build_item_embedding_params(rate_table, genre_weight, F)
    w_feat, w_rate = params
    assert w_feat.shape[0] == 2 * F, "params built for a different feature width"
    num_rate = w_rate.shape[0] // 2
    d = (w_feat.shape[1] - 2) // 4
    wcols = w_feat.shape[1]

    # --- Pack two logical items per physical row (free, row-major reshape). ---
    if B % 2:
        pad = jnp.zeros((1, F), jnp.int32).at[0, 2].set(1)   # one safe dummy item
        fea = jnp.concatenate([item_fea, pad], axis=0)
    else:
        fea = item_fea
    bp = fea.shape[0] // 2
    fea2 = fea.reshape(bp, 2 * F)

    # --- Row tiling over packed rows. ---
    row_tile = max(8, (batch_tile // 16) * 8)   # items -> packed rows, /8 aligned
    if bp <= row_tile:
        # Mid-size batches: use >=2 grid steps so ("parallel",) can shard over
        # v7x's two TensorCores. Harmless on v5e/v6e (single TC).
        if bp >= 512 and bp % 16 == 0:
            tb = bp // 2
        else:
            tb = bp
        bp_pad = bp
    else:
        tb = row_tile
        bp_pad = ((bp + tb - 1) // tb) * tb
        if bp_pad != bp:
            # TODO(synk): replace this pad-concat with a clamped/masked tail tile
            # to avoid the extra HBM copy for large non-multiple batches.
            pad = jnp.zeros((bp_pad - bp, 2 * F), jnp.int32)
            pad = pad.at[:, 2].set(1).at[:, F + 2].set(1)
            fea2 = jnp.concatenate([fea2, pad], axis=0)

    kernel = functools.partial(_item_embedding_packed_kernel,
                               num_rate=num_rate, feat_cols=F)

    out_packed = pl.pallas_call(
        kernel,
        out_shape=jax.ShapeDtypeStruct((bp_pad, 4 * d), jnp.float32),
        grid=(bp_pad // tb,),
        in_specs=[
            pl.BlockSpec((tb, 2 * F), lambda i: (i, 0)),            # packed item rows
            pl.BlockSpec((2 * F, wcols), lambda i: (0, 0)),         # resident weights
            pl.BlockSpec((2 * num_rate, wcols), lambda i: (0, 0)),  # resident rate table
        ],
        out_specs=pl.BlockSpec((tb, 4 * d), lambda i: (i, 0)),      # 128-lane output
        compiler_params=pltpu.CompilerParams(
            dimension_semantics=("parallel",)),
    )(fea2, w_feat, w_rate)

    # Unpack: [bp, 4D] -> [2*bp, 2D] (free reshape), drop padding rows/items.
    out = out_packed[:bp].reshape(2 * bp, 2 * d)
    return out[:B]


def _reference(item_fea, rate_table, genre_weight):
    """Pure-JAX reference mirroring the PyTorch forward."""
    num_genre = genre_weight.shape[1]
    rate_idx = item_fea[:, 1]
    genre = item_fea[:, 2:2 + num_genre].astype(jnp.float32)
    rate_emb = jnp.take(rate_table, rate_idx, axis=0)
    genre_emb = genre @ genre_weight.T / jnp.sum(genre, axis=1, keepdims=True)
    return jnp.concatenate([rate_emb, genre_emb], axis=1)


def _make_inputs(key, batch, num_rate, num_genre, num_feat_cols):
    k1, k2 = jax.random.split(key)
    item_fea = jnp.zeros((batch, num_feat_cols), dtype=jnp.int32)
    rate_col = jax.random.randint(k1, (batch,), 0, num_rate, dtype=jnp.int32)
    genre_block = (jax.random.uniform(k2, (batch, num_genre)) < 0.3).astype(jnp.int32)
    # Ensure at least one genre per row (avoid 0/0, same guard a real dataset gives).
    genre_block = genre_block.at[:, 0].set(
        jnp.where(genre_block.sum(axis=1) == 0, 1, genre_block[:, 0]))
    item_fea = item_fea.at[:, 1].set(rate_col)
    item_fea = item_fea.at[:, 2:2 + num_genre].set(genre_block)
    return item_fea


if __name__ == "__main__":
    # Config consistent with MovieLens usage of this module.
    num_rate, num_genre, embedding_dim = 6, 25, 32
    feat_cols = 30

    key = jax.random.PRNGKey(0)
    k1, k2, k3, k4, k5 = jax.random.split(key, 5)

    rate_table = jax.random.normal(k1, (num_rate, embedding_dim), dtype=jnp.float32)
    genre_weight = (jax.random.uniform(k2, (embedding_dim, num_genre),
                                       dtype=jnp.float32) - 0.5) * (2.0 / jnp.sqrt(num_genre))

    # Build fused weights once; reuse across all calls.
    params = build_item_embedding_params(rate_table, genre_weight, feat_cols)

    # --- Test 1: small batch, single-block path. ---
    batch = 16
    item_fea = _make_inputs(k3, batch, num_rate, num_genre, feat_cols)
    out = jax.block_until_ready(item_embedding_ml(item_fea, params=params))
    ref = _reference(item_fea, rate_table, genre_weight)
    assert out.shape == (batch, 2 * embedding_dim)
    assert jnp.allclose(out, ref, atol=1e-4, rtol=1e-4), "mismatch (small batch)"

    # --- Test 2: odd batch + multi-step tiled grid (forced tiny tile). ---
    batch2 = 37
    item_fea2 = _make_inputs(k4, batch2, num_rate, num_genre, feat_cols)
    out2 = jax.block_until_ready(
        item_embedding_ml(item_fea2, params=params, batch_tile=16))
    ref2 = _reference(item_fea2, rate_table, genre_weight)
    assert out2.shape == (batch2, 2 * embedding_dim)
    assert jnp.allclose(out2, ref2, atol=1e-4, rtol=1e-4), "mismatch (tiled/odd batch)"

    # --- Test 3: mid-size batch -> two grid steps (v7x dual-TC path). ---
    batch3 = 1024
    item_fea3 = _make_inputs(k5, batch3, num_rate, num_genre, feat_cols)
    out3 = jax.block_until_ready(item_embedding_ml(item_fea3, params=params))
    ref3 = _reference(item_fea3, rate_table, genre_weight)
    assert out3.shape == (batch3, 2 * embedding_dim)
    assert jnp.allclose(out3, ref3, atol=1e-4, rtol=1e-4), "mismatch (mid-size batch)"

    print("KERNEL_OK")
</pallas_src>

<mosaic_0001>
module attributes {stable_mosaic.version = 11 : i64} {
  func.func @_item_embedding_packed_kernel(%arg0: i32, %arg1: memref<8x60xi32, #tpu.memory_space<vmem>>, %arg2: memref<60x130xf32, #tpu.memory_space<vmem>>, %arg3: memref<12x130xf32, #tpu.memory_space<vmem>>, %arg4: memref<8x128xf32, #tpu.memory_space<vmem>>) attributes {dimension_semantics = [#tpu.dimension_semantics<parallel>], iteration_bounds = array<i64: 1>, scalar_prefetch = 0 : i64, scratch_operands = 0 : i64, tpu.core_type = #tpu.core_type<tc>, window_params = [{transform_indices = @transform_0, window_bounds = array<i64: 8, 60>}, {pipeline_mode = #tpu.pipeline_mode<synchronous>, transform_indices = @transform_1, window_bounds = array<i64: 60, 130>}, {pipeline_mode = #tpu.pipeline_mode<synchronous>, transform_indices = @transform_2, window_bounds = array<i64: 12, 130>}, {transform_indices = @transform_3, window_bounds = array<i64: 8, 128>}]} {
    %c0 = arith.constant 0 : index
    %c0_0 = arith.constant 0 : index
    %0 = vector.load %arg1[%c0, %c0_0] : memref<8x60xi32, #tpu.memory_space<vmem>>, vector<8x60xi32>
    %1 = arith.sitofp %0 : vector<8x60xi32> to vector<8x60xf32>
    %2 = tpu.iota {dimensions = array<i32: 1>} : vector<8x12xi32>
    %3 = vector.extract_strided_slice %0 {offsets = [0, 1], sizes = [8, 1], strides = [1, 1]} : vector<8x60xi32> to vector<8x1xi32>
    %4 = vector.extract_strided_slice %0 {offsets = [0, 31], sizes = [8, 1], strides = [1, 1]} : vector<8x60xi32> to vector<8x1xi32>
    %c6_i32 = arith.constant 6 : i32
    %5 = vector.broadcast %c6_i32 : i32 to vector<8x1xi32>
    %6 = arith.addi %4, %5 : vector<8x1xi32>
    %c6_i32_1 = arith.constant 6 : i32
    %7 = vector.broadcast %c6_i32_1 : i32 to vector<8x12xi32>
    %8 = arith.cmpi slt, %2, %7 : vector<8x12xi32>
    %9 = vector.shape_cast %3 : vector<8x1xi32> to vector<8x1xi32>
    %10 = vector.broadcast %9 : vector<8x1xi32> to vector<8x12xi32>
    %11 = vector.shape_cast %6 : vector<8x1xi32> to vector<8x1xi32>
    %12 = vector.broadcast %11 : vector<8x1xi32> to vector<8x12xi32>
    %13 = arith.select %8, %10, %12 : vector<8x12xi1>, vector<8x12xi32>
    %14 = arith.cmpi eq, %2, %13 : vector<8x12xi32>
    %15 = arith.extui %14 : vector<8x12xi1> to vector<8x12xi32>
    %16 = arith.sitofp %15 : vector<8x12xi32> to vector<8x12xf32>
    %c0_2 = arith.constant 0 : index
    %c0_3 = arith.constant 0 : index
    %17 = vector.load %arg2[%c0_2, %c0_3] : memref<60x130xf32, #tpu.memory_space<vmem>>, vector<60x130xf32>
    %cst = arith.constant dense<0.000000e+00> : vector<8x130xf32>
    %18 = tpu.matmul %1, %17, %cst {dimension_numbers = #tpu.dot_dimension_numbers<[1], [0], [0], [1], [0, 0, 1, 1], [], []>} : vector<8x60xf32>, vector<60x130xf32>, vector<8x130xf32> -> vector<8x130xf32>
    %c0_4 = arith.constant 0 : index
    %c0_5 = arith.constant 0 : index
    %19 = vector.load %arg3[%c0_4, %c0_5] : memref<12x130xf32, #tpu.memory_space<vmem>>, vector<12x130xf32>
    %cst_6 = arith.constant dense<0.000000e+00> : vector<8x130xf32>
    %20 = tpu.matmul %16, %19, %cst_6 {dimension_numbers = #tpu.dot_dimension_numbers<[1], [0], [0], [1], [0, 0, 1, 1], [], []>} : vector<8x12xf32>, vector<12x130xf32>, vector<8x130xf32> -> vector<8x130xf32>
    %21 = arith.addf %18, %20 : vector<8x130xf32>
    %22 = vector.extract_strided_slice %21 {offsets = [0, 0], sizes = [8, 128], strides = [1, 1]} : vector<8x130xf32> to vector<8x128xf32>
    %23 = vector.extract_strided_slice %21 {offsets = [0, 128], sizes = [8, 2], strides = [1, 1]} : vector<8x130xf32> to vector<8x2xf32>
    %24 = tpu.reciprocal %23 : vector<8x2xf32> -> vector<8x2xf32>
    %25 = tpu.iota {dimensions = array<i32: 1>} : vector<8x128xi32>
    %c32_i32 = arith.constant 32 : i32
    %26 = vector.broadcast %c32_i32 : i32 to vector<8x128xi32>
    %27 = arith.cmpi sge, %25, %26 : vector<8x128xi32>
    %c64_i32 = arith.constant 64 : i32
    %28 = vector.broadcast %c64_i32 : i32 to vector<8x128xi32>
    %29 = arith.cmpi slt, %25, %28 : vector<8x128xi32>
    %30 = arith.andi %27, %29 : vector<8x128xi1>
    %31 = vector.extract_strided_slice %24 {offsets = [0, 0], sizes = [8, 1], strides = [1, 1]} : vector<8x2xf32> to vector<8x1xf32>
    %c96_i32 = arith.constant 96 : i32
    %32 = vector.broadcast %c96_i32 : i32 to vector<8x128xi32>
    %33 = arith.cmpi sge, %25, %32 : vector<8x128xi32>
    %34 = vector.extract_strided_slice %24 {offsets = [0, 1], sizes = [8, 1], strides = [1, 1]} : vector<8x2xf32> to vector<8x1xf32>
    %cst_7 = arith.constant 1.000000e+00 : f32
    %35 = vector.shape_cast %34 : vector<8x1xf32> to vector<8x1xf32>
    %36 = vector.broadcast %35 : vector<8x1xf32> to vector<8x128xf32>
    %37 = vector.broadcast %cst_7 : f32 to vector<8x128xf32>
    %38 = arith.select %33, %36, %37 : vector<8x128xi1>, vector<8x128xf32>
    %39 = vector.shape_cast %31 : vector<8x1xf32> to vector<8x1xf32>
    %40 = vector.broadcast %39 : vector<8x1xf32> to vector<8x128xf32>
    %41 = arith.select %30, %40, %38 : vector<8x128xi1>, vector<8x128xf32>
    %42 = arith.mulf %22, %41 : vector<8x128xf32>
    %c0_8 = arith.constant 0 : index
    %c0_9 = arith.constant 0 : index
    %43 = vector.load %arg4[%c0_8, %c0_9] : memref<8x128xf32, #tpu.memory_space<vmem>>, vector<8x128xf32>
    tpu.vector_store %arg4[%c0_8, %c0_9], %42 {strides = array<i32>} : memref<8x128xf32, #tpu.memory_space<vmem>>, vector<8x128xf32>,
    return
  }
  func.func @transform_0(%arg0: i32) -> (i32, i32) {
    %c0_i32 = arith.constant 0 : i32
    %c0_i32_0 = arith.constant 0 : i32
    return %arg0, %c0_i32 : i32, i32
  }
  func.func @transform_1(%arg0: i32) -> (i32, i32) {
    %c0_i32 = arith.constant 0 : i32
    %c0_i32_0 = arith.constant 0 : i32
    %c0_i32_1 = arith.constant 0 : i32
    return %c0_i32, %c0_i32_0 : i32, i32
  }
  func.func @transform_2(%arg0: i32) -> (i32, i32) {
    %c0_i32 = arith.constant 0 : i32
    %c0_i32_0 = arith.constant 0 : i32
    %c0_i32_1 = arith.constant 0 : i32
    return %c0_i32, %c0_i32_0 : i32, i32
  }
  func.func @transform_3(%arg0: i32) -> (i32, i32) {
    %c0_i32 = arith.constant 0 : i32
    %c0_i32_0 = arith.constant 0 : i32
    return %arg0, %c0_i32 : i32, i32
  }
}

</mosaic_0001>

<llo_original>
// kernel: tpu_custom_call.1
$region0: #{tpu_custom_call.1}
  #allocation0 [shape = 'u32[]', space=smem, size = 0x4, offset = 0x4, fixed_abs, tag = 'smem constant byte address 0x4 - core index']
  #allocation1 [shape = 'u32[144,128]{1,0:T(1,128)}', space=vmem, size = 0x12000, scoped, tag = 'internal scratch']
  %s0 = inlined_call_operand.hbm [shape: s32[8,60], index: 0, kind: input, shape index: {}]
  %s1 = inlined_call_operand.hbm [shape: f32[60,130], index: 1, kind: input, shape index: {}]
  %s2 = inlined_call_operand.hbm [shape: f32[12,130], index: 2, kind: input, shape index: {}]
  %s3 = inlined_call_operand.hbm [shape: f32[8,128], index: 3, kind: output, shape index: {}]
  %s4 = sld [smem:[#allocation0]]
  $region34: #{tpu_custom_call.1} parent=0
    _
  %s6 = ssub.s32 1, %s4
  %s7 = scalar_select 0, %s6, %s4
  $region1: #{tpu_custom_call.1} parent=0
    #allocation2 [shape = 'u8[4096]{0}', space=vmem, size = 0x1000, scoped, tag = 'input window, operand 0, single buffered']
    #allocation3 [shape = 's32[1]{0}', space=sflag, size = 0x4, scoped, tag = 'scoped memory for tpu_custom_call.1']
    #allocation4 [shape = 's32[1]{0}', space=sflag, size = 0x4, scoped, tag = 'scoped memory for tpu_custom_call.1']
    #allocation5 [shape = 'u8[65536]{0}', space=vmem, size = 0x10000, scoped, tag = 'input window, operand 1, single buffered']
    #allocation6 [shape = 's32[1]{0}', space=sflag, size = 0x4, scoped, tag = 'scoped memory for tpu_custom_call.1']
    #allocation7 [shape = 'u8[16384]{0}', space=vmem, size = 0x4000, scoped, tag = 'input window, operand 2, single buffered']
    #allocation8 [shape = 'u8[4096]{0}', space=vmem, size = 0x1000, scoped, tag = 'output window, operand 0, single buffered']
    %8 = vsyncpa [#allocation3], 0
    %9 = vsyncpa [#allocation6], 0
    %10 = vsyncpa [#allocation4], 0
    // Predicated region
    $region2: #{tpu_custom_call.1} parent=1 // pred_check
      _
    $region3: #{tpu_custom_call.1} parent=1 // pred_check_branch
      %12 = sbr.rel (0) target = $region5
    $region4: #{tpu_custom_call.1} parent=1 // pred_region
      %s14 = ssub.s32 128, 128
      %15 = vsyncadd [#allocation3], %s14
      %s17 = sshll.u32 [#allocation2], 4
      %s18 = int_to_ptr.vmem [resolvable:$true] %s17
      %20 = dma.hbm_to_vmem [thread:$0]  %s0, 128, %s18, [#allocation3]
    $region5: #{tpu_custom_call.1} parent=1 // pred_fallthru
      _
    // Predicated region
    $region6: #{tpu_custom_call.1} parent=1 // pred_check
      _
    $region7: #{tpu_custom_call.1} parent=1 // pred_check_branch
      %22 = sbr.rel (0) target = $region9
    $region8: #{tpu_custom_call.1} parent=1 // pred_region
      %s24 = ssub.s32 2048, 2048
      %25 = vsyncadd [#allocation6], %s24
      %s26 = sshll.u32 [#allocation5], 4
      %s27 = int_to_ptr.vmem [resolvable:$true] %s26
      %32 = dma.hbm_to_vmem [thread:$0]  %s1, 2048, %s27, [#allocation6], 256, 256, 16
    $region9: #{tpu_custom_call.1} parent=1 // pred_fallthru
      _
    // Predicated region
    $region10: #{tpu_custom_call.1} parent=1 // pred_check
      _
    $region11: #{tpu_custom_call.1} parent=1 // pred_check_branch
      %34 = sbr.rel (0) target = $region13
    $region12: #{tpu_custom_call.1} parent=1 // pred_region
      %s36 = ssub.s32 512, 512
      %37 = vsyncadd [#allocation6], %s36
      %s38 = sshll.u32 [#allocation7], 4
      %s39 = int_to_ptr.vmem [resolvable:$true] %s38
      %44 = dma.hbm_to_vmem [thread:$0]  %s2, 512, %s39, [#allocation6], 256, 256, 16
    $region13: #{tpu_custom_call.1} parent=1 // pred_fallthru
      _
    // Predicated region
    $region14: #{tpu_custom_call.1} parent=1 // pred_check
      _
    $region15: #{tpu_custom_call.1} parent=1 // pred_check_branch
      %46 = sbr.rel (0) target = $region17
    $region16: #{tpu_custom_call.1} parent=1 // pred_region
      %47 = dma.done [#allocation3], 128
    $region17: #{tpu_custom_call.1} parent=1 // pred_fallthru
      _
    // Predicated region
    $region18: #{tpu_custom_call.1} parent=1 // pred_check
      _
    $region19: #{tpu_custom_call.1} parent=1 // pred_check_branch
      %49 = sbr.rel (0) target = $region21
    $region20: #{tpu_custom_call.1} parent=1 // pred_region
      %50 = dma.done [#allocation6], 2048
    $region21: #{tpu_custom_call.1} parent=1 // pred_fallthru
      _
    // Predicated region
    $region22: #{tpu_custom_call.1} parent=1 // pred_check
      _
    $region23: #{tpu_custom_call.1} parent=1 // pred_check_branch
      %52 = sbr.rel (0) target = $region25
    $region24: #{tpu_custom_call.1} parent=1 // pred_region
      %53 = dma.done [#allocation6], 512
    $region25: #{tpu_custom_call.1} parent=1 // pred_fallthru
      _
    %v54 = vld [vmem:[#allocation2] sm:$0xff]
    %v55 = vcvt.s32.f32 %v54
    %v56 = vlaneseq
    %v57 = vand.u32 %v56, 127
    %v58 = vadd.s32 %v54, 6
    %vm59 = vcmp.lt.s32.totalorder %v57, 6
    %60 = vset.pattern.permute.xlu0 1
    %61 = vperm.xlu0 %60, %v54
    %v62 = vpop.permute.xlu0 %61
    %63 = vset.pattern.permute.xlu0 31
    %64 = vperm.xlu0 %63, %v58
    %v65 = vpop.permute.xlu0 %64
    %v66 = vsel %vm59, %v62, %v65
    %vm67 = vcmp.eq.s32.totalorder %v57, %v66
    %v68 = vsel %vm67, 1, 0
    %v69 = vcvt.s32.f32 %v68
    %v70 = vld [vmem:[#allocation5] sm:$0xff]
    %v71 = vld [vmem:[#allocation5 + $0x8] sm:$0xff]
    %v72 = vld [vmem:[#allocation5 + $0x10] sm:$0xff]
    %v73 = vld [vmem:[#allocation5 + $0x18] sm:$0xff]
    %v74 = vld [vmem:[#allocation5 + $0x20] sm:$0xff]
    %v75 = vld [vmem:[#allocation5 + $0x28] sm:$0xff]
    %v76 = vld [vmem:[#allocation5 + $0x30] sm:$0xff]
    %v77 = vld [vmem:[#allocation5 + $0x38] sm:$0xff]
    %v78 = vld [vmem:[#allocation5 + $0x40] sm:$0xff]
    %v79 = vld [vmem:[#allocation5 + $0x48] sm:$0xff]
    %v80 = vld [vmem:[#allocation5 + $0x50] sm:$0xff]
    %v81 = vld [vmem:[#allocation5 + $0x58] sm:$0xff]
    %v82 = vld [vmem:[#allocation5 + $0x60] sm:$0xff]
    %v83 = vld [vmem:[#allocation5 + $0x68] sm:$0xff]
    %v84 = vld [vmem:[#allocation5 + $0x70] sm:$0xf]
    %v85 = vld [vmem:[#allocation5 + $0x78] sm:$0xf]
    %v86 = vld [vmem:[#allocation7] sm:$0xff]
    %v87 = vld [vmem:[#allocation7 + $0x8] sm:$0xff]
    %v88 = vld [vmem:[#allocation7 + $0x10] sm:$0xf]
    %v89 = vld [vmem:[#allocation7 + $0x18] sm:$0xf]
    %vm90 = vcmask 97280
    %v92 = vsel %vm90, %v69, 0
    %vm94 = vcmask 1043456
    %v96 = vsel %vm94, %v88, 0
    %v99 = vsel %vm94, %v89, 0
    %101 = vmatprep.subr.mxu0 %v87
    %102 = vmatpush1.msra.mxu0 %v86
    %103 = vmatprep.subr.mxu0 %v99
    %104 = vmatpush1.msra.mxu0 %v96
    %105 = vmatprep.subr.mxu0 0.0
    %106 = vmatpush1.msra.mxu0 0.0
    %107 = vmatprep.subr.mxu0 0.0
    %108 = vmatpush1.msra.mxu0 0.0
    %109 = vmatprep.subr.mxu0 0.0
    %110 = vmatpush1.msra.mxu0 0.0
    %111 = vmatprep.subr.mxu0 0.0
    %112 = vmatpush1.msra.mxu0 0.0
    %113 = vmatprep.subr.mxu0 0.0
    %114 = vmatpush1.msra.mxu0 0.0
    %115 = vmatprep.subr.mxu0 0.0
    %116 = vmatpush1.msra.mxu0 0.0
    %117 = vmatprep.subr.mxu0 0.0
    %118 = vmatpush1.msra.mxu0 0.0
    %119 = vmatprep.subr.mxu0 0.0
    %120 = vmatpush1.msra.mxu0 0.0
    %121 = vmatprep.subr.mxu0 0.0
    %122 = vmatpush1.msra.mxu0 0.0
    %123 = vmatprep.subr.mxu0 0.0
    %124 = vmatpush1.msra.mxu0 0.0
    %125 = vmatprep.subr.mxu0 0.0
    %126 = vmatpush1.msra.mxu0 0.0
    %127 = vmatprep.subr.mxu0 0.0
    %128 = vmatpush1.msra.mxu0 0.0
    %129 = vmatprep.subr.mxu0 0.0
    %130 = vmatpush1.msra.mxu0 0.0
    %131 = vmatprep.subr.mxu0 0.0
    %132 = vmatpush1.msra.mxu0 0.0
    %133 = vmatprep.subr.mxu0 0.0
    %134 = vmatpush1.msra.mxu0 0.0
    %135 = vmatprep.subr.mxu0 0.0
    %136 = vmatpush1.msra.mxu0 0.0
    %137 = vmatprep.subr.mxu0 0.0
    %138 = vmatpush1.msra.mxu0 0.0
    %139 = vmatprep.subr.mxu0 0.0
    %140 = vmatpush1.msra.mxu0 0.0
    %141 = vmatprep.subr.mxu0 0.0
    %142 = vmatpush1.msra.mxu0 0.0
    %143 = vmatprep.subr.mxu0 0.0
    %144 = vmatpush1.msra.mxu0 0.0
    %145 = vmatprep.subr.mxu0 0.0
    %146 = vmatpush1.msra.mxu0 0.0
    %147 = vmatprep.subr.mxu0 0.0
    %148 = vmatpush1.msra.mxu0 0.0
    %149 = vmatprep.subr.mxu0 0.0
    %150 = vmatpush1.msra.mxu0 0.0
    %151 = vmatprep.subr.mxu0 0.0
    %152 = vmatpush1.msra.mxu0 0.0
    %153 = vmatprep.subr.mxu0 0.0
    %154 = vmatpush1.msra.mxu0 0.0
    %155 = vmatprep.subr.mxu0 0.0
    %156 = vmatpush1.msra.mxu0 0.0
    %157 = vmatprep.subr.mxu0 0.0
    %158 = vmatpush1.msra.mxu0 0.0
    %159 = vmatprep.subr.mxu0 0.0
    %160 = vmatpush1.msra.mxu0 0.0
    %161 = vmatprep.subr.mxu0 0.0
    %162 = vmatpush1.msra.mxu0 0.0
    %163 = vmatprep.subr.mxu0 0.0
    %164 = vmatpush1.msra.mxu0 0.0
    %165 = vmatprep.mubr.f32.mxu0 0.0
    %166 = vmatmul.mubr.f32.gmra.mrb[0].mxu0 %v92
    %v167 = vpop.f32.mrb[0].mxu0
    %v168 = vadd.f32 0.0, %v167
    %v169 = vpop.f32.mrb[0].mxu0
    %v170 = vadd.f32 0.0, %v169
    %171 = vdwg.mxu0
    %vm172 = vcmask 490496
    %v174 = vsel %vm172, %v55, 0
    %v177 = vsel %vm94, %v84, 0
    %v180 = vsel %vm94, %v85, 0
    %182 = vmatprep.subr.mxu0 %v71
    %183 = vmatpush1.msra.mxu0 %v70
    %184 = vmatprep.subr.mxu0 %v73
    %185 = vmatpush1.msra.mxu0 %v72
    %186 = vmatprep.subr.mxu0 %v75
    %187 = vmatpush1.msra.mxu0 %v74
    %188 = vmatprep.subr.mxu0 %v77
    %189 = vmatpush1.msra.mxu0 %v76
    %190 = vmatprep.subr.mxu0 %v79
    %191 = vmatpush1.msra.mxu0 %v78
    %192 = vmatprep.subr.mxu0 %v81
    %193 = vmatpush1.msra.mxu0 %v80
    %194 = vmatprep.subr.mxu0 %v83
    %195 = vmatpush1.msra.mxu0 %v82
    %196 = vmatprep.subr.mxu0 %v180
    %197 = vmatpush1.msra.mxu0 %v177
    %198 = vmatprep.subr.mxu0 0.0
    %199 = vmatpush1.msra.mxu0 0.0
    %200 = vmatprep.subr.mxu0 0.0
    %201 = vmatpush1.msra.mxu0 0.0
    %202 = vmatprep.subr.mxu0 0.0
    %203 = vmatpush1.msra.mxu0 0.0
    %204 = vmatprep.subr.mxu0 0.0
    %205 = vmatpush1.msra.mxu0 0.0
    %206 = vmatprep.subr.mxu0 0.0
    %207 = vmatpush1.msra.mxu0 0.0
    %208 = vmatprep.subr.mxu0 0.0
    %209 = vmatpush1.msra.mxu0 0.0
    %210 = vmatprep.subr.mxu0 0.0
    %211 = vmatpush1.msra.mxu0 0.0
    %212 = vmatprep.subr.mxu0 0.0
    %213 = vmatpush1.msra.mxu0 0.0
    %214 = vmatprep.subr.mxu0 0.0
    %215 = vmatpush1.msra.mxu0 0.0
    %216 = vmatprep.subr.mxu0 0.0
    %217 = vmatpush1.msra.mxu0 0.0
    %218 = vmatprep.subr.mxu0 0.0
    %219 = vmatpush1.msra.mxu0 0.0
    %220 = vmatprep.subr.mxu0 0.0
    %221 = vmatpush1.msra.mxu0 0.0
    %222 = vmatprep.subr.mxu0 0.0
    %223 = vmatpush1.msra.mxu0 0.0
    %224 = vmatprep.subr.mxu0 0.0
    %225 = vmatpush1.msra.mxu0 0.0
    %226 = vmatprep.subr.mxu0 0.0
    %227 = vmatpush1.msra.mxu0 0.0
    %228 = vmatprep.subr.mxu0 0.0
    %229 = vmatpush1.msra.mxu0 0.0
    %230 = vmatprep.subr.mxu0 0.0
    %231 = vmatpush1.msra.mxu0 0.0
    %232 = vmatprep.subr.mxu0 0.0
    %233 = vmatpush1.msra.mxu0 0.0
    %234 = vmatprep.subr.mxu0 0.0
    %235 = vmatpush1.msra.mxu0 0.0
    %236 = vmatprep.subr.mxu0 0.0
    %237 = vmatpush1.msra.mxu0 0.0
    %238 = vmatprep.subr.mxu0 0.0
    %239 = vmatpush1.msra.mxu0 0.0
    %240 = vmatprep.subr.mxu0 0.0
    %241 = vmatpush1.msra.mxu0 0.0
    %242 = vmatprep.subr.mxu0 0.0
    %243 = vmatpush1.msra.mxu0 0.0
    %244 = vmatprep.subr.mxu0 0.0
    %245 = vmatpush1.msra.mxu0 0.0
    %246 = vmatprep.mubr.f32.mxu0 0.0
    %247 = vmatmul.mubr.f32.gmra.mrb[0].mxu0 %v174
    %v248 = vpop.f32.mrb[0].mxu0
    %v249 = vadd.f32 %v168, %v248
    %v250 = vpop.f32.mrb[0].mxu0
    %v251 = vadd.f32 %v170, %v250
    %252 = vdwg.mxu0
    %v253 = vrcp.pop %v251
    %vm254 = vcmp.ge.s32.totalorder %v57, 32
    %vm255 = vcmp.lt.s32.totalorder %v57, 64
    %vm256 = vmand %vm254, %vm255
    %vm257 = vcmp.ge.s32.totalorder %v57, 96
    %259 = vset.pattern.permute.xlu0 1
    %260 = vperm.xlu0 %259, %v253
    %v261 = vpop.permute.xlu0 %260
    %v263 = vsel %vm257, %v261, 1.0
    %264 = vset.pattern.permute.xlu0 0
    %265 = vperm.xlu0 %264, %v253
    %v266 = vpop.permute.xlu0 %265
    %v268 = vsel %vm256, %v266, %v263
    %v269 = vmul.f32 %v249, %v268
    %270 = vst [vmem:[#allocation8] sm:$0xff] %v269
    // Predicated region
    $region26: #{tpu_custom_call.1} parent=1 // pred_check
      _
    $region27: #{tpu_custom_call.1} parent=1 // pred_check_branch
      %272 = sbr.rel (0) target = $region29
    $region28: #{tpu_custom_call.1} parent=1 // pred_region
      %s274 = ssub.s32 128, 128
      %275 = vsyncadd [#allocation4], %s274
      %s277 = sshll.u32 [#allocation8], 4
      %s278 = int_to_ptr.vmem [resolvable:$true] %s277
      %280 = dma.vmem_to_hbm [thread:$0]  %s278, 128, %s3, [#allocation4]
    $region29: #{tpu_custom_call.1} parent=1 // pred_fallthru
      _
    // Predicated region
    $region30: #{tpu_custom_call.1} parent=1 // pred_check
      _
    $region31: #{tpu_custom_call.1} parent=1 // pred_check_branch
      %282 = sbr.rel (0) target = $region33
    $region32: #{tpu_custom_call.1} parent=1 // pred_region
      %283 = dma.done [#allocation4], 128
    $region33: #{tpu_custom_call.1} parent=1 // pred_fallthru
      _
    %284 = vsyncpa [#allocation3], 1
    %285 = vsyncpa [#allocation6], 1
    %286 = vsyncpa [#allocation4], 1

</llo_original>
